<compile_context>
chip_gen: v7x
topology: tpu7x:2x2x1
jax: 0.10.0
libtpu: 0.0.40
codegen_flags: <defaults>
</compile_context>

<pallas_src>
import numpy as np
import jax
import jax.numpy as jnp
from jax.experimental import pallas as pl
from jax.experimental.pallas import tpu as pltpu

BOLTZMANN = 5.67e-08
N_NODES = 169          # 13 * 13


# ----------------------------- constants / matrices --------------------------

def build_matrices(L: float = 0.1, thickness: float = 0.001,
                   board_k: float = 15.0, ir_emmisivity: float = 0.8):
    """Dense K (N,N) and diag(E) (N,), exactly as the PyTorch module builds them."""
    nx, ny = 13, 13
    n_nodes = nx * ny
    interfaces = [0, nx - 1, nx * nx - 1, nx * nx - nx]
    dx = L / (nx - 1)
    dy = L / (ny - 1)
    GLx = thickness * board_k * dy / dx
    GLy = thickness * board_k * dx / dy
    GR = 2 * dx * dy * ir_emmisivity

    K = np.zeros((n_nodes, n_nodes), dtype=np.float32)
    for j in range(ny):
        for i in range(nx):
            nid = i + nx * j
            if nid in interfaces:
                K[nid, nid] = 1.0
            else:
                GLii = 0.0
                if i + 1 < nx:
                    K[nid, nid + 1] = -GLx
                    GLii += GLx
                if i - 1 >= 0:
                    K[nid, nid - 1] = -GLx
                    GLii += GLx
                if j + 1 < ny:
                    K[nid, nid + nx] = -GLy
                    GLii += GLy
                if j - 1 >= 0:
                    K[nid, nid - nx] = -GLy
                    GLii += GLy
                K[nid, nid] = GLii

    E_diag = np.zeros((n_nodes,), dtype=np.float32)
    for nid in range(n_nodes):
        if nid not in interfaces:
            E_diag[nid] = GR
    return K, E_diag


def prepare_constants(K, E_diag):
    """K^T (169,169) and Boltzmann * diag(E) as a (1,169) row (no padding needed)."""
    kt = np.ascontiguousarray(np.asarray(K, np.float32).T)
    ed = (BOLTZMANN * np.asarray(E_diag, np.float32)).reshape(1, N_NODES)
    return jnp.asarray(kt), jnp.asarray(ed)


# --------------------------------- Pallas kernel -----------------------------

def _make_kernel(batch_size: int, tb: int, ragged: bool):
    """Kernel closure over static batch size / tile size (no scalar prefetch needed)."""

    def kernel(kt_ref, ed_ref, t_ref, h_ref, i_ref, tenv_ref, psum_ref):
        # kt_ref:   (169, 169)  K^T, VMEM-resident across tiles
        # ed_ref:   (1, 169)    Boltzmann * diag(E), resident
        # t_ref:    (TB, 169)   batch tile of temperatures
        # h_ref:    (TB, 169)   batch tile of heater powers
        # i_ref:    (TB, 169)   batch tile of interface powers
        # tenv_ref: (TB, 1)     environment temperature per sample
        # psum_ref: (1, 1)      this tile's partial sum of |excess|
        t = t_ref[...]
        q = h_ref[...] + i_ref[...]          # fused Q = heaters + interfaces (VPU)
        tenv = tenv_ref[...]

        # (K @ T)^T == T @ K^T : (TB, 169) @ (169, 169) on the MXU, f32 accumulate.
        kt_t = jnp.dot(t, kt_ref[...], preferred_element_type=jnp.float32)

        # Radiative term: E is diagonal -> elementwise scale by sigma*diag(E).
        # Explicit squaring so t**4 lowers to two VPU multiplies.
        t2 = t * t
        t4 = t2 * t2
        te2 = tenv * tenv
        te4 = te2 * te2
        rad = ed_ref[...] * (t4 - te4)

        excess = jnp.abs(kt_t + rad - q)                      # (TB, 169)

        if ragged:
            # Last tile extends past B: out-of-bounds rows hold undefined data,
            # mask them out before the reduction (B, TB are Python ints).
            rows = pl.program_id(0) * tb + jax.lax.broadcasted_iota(
                jnp.int32, (tb, 1), 0)
            excess = jnp.where(rows < batch_size, excess, 0.0)

        psum_ref[...] = jnp.sum(excess, keepdims=True)        # (1, 1)

    return kernel


# ----------------------------------- wrapper ----------------------------------

def _cdiv(a, b):
    return (a + b - 1) // b


def _round_up(x, m):
    return _cdiv(x, m) * m


def la_energia_no_aparece(outputs, heaters, interfaces, tenv, kt, ed,
                          *, tb: int = 1024):
    """Batch-tiled Pallas implementation of LaEnergiaNoAparece.forward.

    outputs / heaters / interfaces: (B, 1, 13, 13); tenv: (B, 1).
    kt: (169, 169) K^T; ed: (1, 169) Boltzmann * diag(E).
    Returns the scalar mean(|excessEnergy|) over the true B * 169 entries.
    """
    B = outputs.shape[0]

    # Metadata-only reshapes: no HBM copies, no padding passes.
    T = outputs.reshape(B, N_NODES).astype(jnp.float32)
    H = heaters.reshape(B, N_NODES).astype(jnp.float32)
    I = interfaces.reshape(B, N_NODES).astype(jnp.float32)
    Te = tenv.reshape(B, 1).astype(jnp.float32)

    # Tile size: multiple of 8, capped so there are >= 2 tiles whenever B >= 16
    # (lets the "parallel" batch axis use both v7x TensorCores).  If a single
    # tile covers the batch, shrink it to exactly B (block == full dim is legal
    # for any B, including B not a multiple of 8).
    tb_cap = _round_up(_cdiv(B, 2), 8)
    TB = max(8, min(_round_up(tb, 8), tb_cap))
    if TB >= B:
        TB = B
    num_tiles = _cdiv(B, TB)
    ragged = (B % TB) != 0

    kernel = _make_kernel(B, TB, ragged)

    flops = 2 * B * N_NODES * N_NODES + 10 * B * N_NODES
    bytes_accessed = 4 * (3 * B * N_NODES + B
                          + N_NODES * N_NODES + N_NODES + num_tiles)

    psums = pl.pallas_call(
        kernel,
        out_shape=jax.ShapeDtypeStruct((num_tiles, 1), jnp.float32),
        grid_spec=pltpu.PrefetchScalarGridSpec(
            num_scalar_prefetch=0,
            grid=(num_tiles,),
            in_specs=[
                pl.BlockSpec((N_NODES, N_NODES), lambda i: (0, 0)),  # K^T (resident)
                pl.BlockSpec((1, N_NODES),       lambda i: (0, 0)),  # diag (resident)
                pl.BlockSpec((TB, N_NODES),      lambda i: (i, 0)),  # T tile
                pl.BlockSpec((TB, N_NODES),      lambda i: (i, 0)),  # heaters tile
                pl.BlockSpec((TB, N_NODES),      lambda i: (i, 0)),  # interfaces tile
                pl.BlockSpec((TB, 1),            lambda i: (i, 0)),  # Tenv tile
            ],
            out_specs=pl.BlockSpec((1, 1), lambda i: (i, 0)),
        ),
        compiler_params=pltpu.CompilerParams(
            dimension_semantics=("parallel",)),
        cost_estimate=pl.CostEstimate(flops=flops, transcendentals=0,
                                      bytes_accessed=bytes_accessed),
    )(kt, ed, T, H, I, Te)

    # Final reduction over per-tile partials; divide by the TRUE element count.
    return jnp.sum(psums) / jnp.float32(B * N_NODES)


# ------------------------------------ main ------------------------------------

if __name__ == "__main__":
    K, E_diag = build_matrices()
    KT, EdB = prepare_constants(K, E_diag)

    loss_fn = jax.jit(la_energia_no_aparece, static_argnames=("tb",))

    def reference(outputs, heaters, interfaces, tenv):
        # Pure-JAX reference, node-major, exactly like the PyTorch forward.
        B = outputs.shape[0]
        T = outputs.reshape(B, -1).T.astype(jnp.float32)
        Q = (heaters.reshape(B, -1) + interfaces.reshape(B, -1)).T.astype(jnp.float32)
        Te = tenv.reshape(B, 1).T.astype(jnp.float32)
        Kj = jnp.asarray(K)
        Ej = jnp.diag(jnp.asarray(E_diag))
        excess = Kj @ T + BOLTZMANN * (Ej @ (T ** 4 - Te ** 4)) - Q
        return jnp.mean(jnp.abs(excess))

    keys = jax.random.split(jax.random.PRNGKey(0), 8)

    # Small case from the spec: B = 2 (single tile, block == full batch dim).
    B = 2
    outputs = 300.0 + 10.0 * jax.random.normal(keys[0], (B, 1, 13, 13), jnp.float32)
    heaters = 0.1 * jax.random.uniform(keys[1], (B, 1, 13, 13), jnp.float32)
    interfaces = 0.05 * jax.random.uniform(keys[2], (B, 1, 13, 13), jnp.float32)
    tenv = 250.0 + 5.0 * jax.random.normal(keys[3], (B, 1), jnp.float32)

    loss = jax.block_until_ready(
        loss_fn(outputs, heaters, interfaces, tenv, KT, EdB))
    ref = reference(outputs, heaters, interfaces, tenv)
    assert jnp.allclose(loss, ref, rtol=1e-4, atol=1e-4), (loss, ref)

    # Larger case exercising multiple grid tiles + an in-kernel ragged row mask:
    # B = 37, tb = 16  ->  TB = 16, 3 parallel tiles, last tile masked (rows 32..36).
    B = 37
    outputs = 300.0 + 10.0 * jax.random.normal(keys[4], (B, 1, 13, 13), jnp.float32)
    heaters = 0.1 * jax.random.uniform(keys[5], (B, 1, 13, 13), jnp.float32)
    interfaces = 0.05 * jax.random.uniform(keys[6], (B, 1, 13, 13), jnp.float32)
    tenv = 250.0 + 5.0 * jax.random.normal(keys[7], (B, 1), jnp.float32)

    loss2 = jax.block_until_ready(
        loss_fn(outputs, heaters, interfaces, tenv, KT, EdB, tb=16))
    ref2 = reference(outputs, heaters, interfaces, tenv)
    assert jnp.allclose(loss2, ref2, rtol=1e-4, atol=1e-4), (loss2, ref2)

    # Same batch with the default tile: TB capped at round_up(cdiv(37,2),8)=24
    # -> 2 tiles (v7x two-TensorCore sharding path), ragged second tile.
    loss3 = jax.block_until_ready(
        loss_fn(outputs, heaters, interfaces, tenv, KT, EdB))
    assert jnp.allclose(loss3, ref2, rtol=1e-4, atol=1e-4), (loss3, ref2)

    print("KERNEL_OK")
</pallas_src>

<mosaic_0001>
module attributes {stable_mosaic.version = 11 : i64} {
  func.func @kernel(%arg0: i32, %arg1: memref<169x169xf32, #tpu.memory_space<vmem>>, %arg2: memref<1x169xf32, #tpu.memory_space<vmem>>, %arg3: memref<2x169xf32, #tpu.memory_space<vmem>>, %arg4: memref<2x169xf32, #tpu.memory_space<vmem>>, %arg5: memref<2x169xf32, #tpu.memory_space<vmem>>, %arg6: memref<2x1xf32, #tpu.memory_space<vmem>>, %arg7: memref<1x1xf32, #tpu.memory_space<vmem>>) attributes {dimension_semantics = [#tpu.dimension_semantics<parallel>], iteration_bounds = array<i64: 1>, scalar_prefetch = 0 : i64, scratch_operands = 0 : i64, tpu.core_type = #tpu.core_type<tc>, window_params = [{pipeline_mode = #tpu.pipeline_mode<synchronous>, transform_indices = @transform_0, window_bounds = array<i64: 169, 169>}, {pipeline_mode = #tpu.pipeline_mode<synchronous>, transform_indices = @transform_1, window_bounds = array<i64: 1, 169>}, {transform_indices = @transform_2, window_bounds = array<i64: 2, 169>}, {transform_indices = @transform_3, window_bounds = array<i64: 2, 169>}, {transform_indices = @transform_4, window_bounds = array<i64: 2, 169>}, {transform_indices = @transform_5, window_bounds = array<i64: 2, 1>}, {transform_indices = @transform_6, window_bounds = array<i64: 1, 1>}]} {
    %c0 = arith.constant 0 : index
    %c0_0 = arith.constant 0 : index
    %0 = vector.load %arg3[%c0, %c0_0] : memref<2x169xf32, #tpu.memory_space<vmem>>, vector<2x169xf32>
    %c0_1 = arith.constant 0 : index
    %c0_2 = arith.constant 0 : index
    %1 = vector.load %arg4[%c0_1, %c0_2] : memref<2x169xf32, #tpu.memory_space<vmem>>, vector<2x169xf32>
    %c0_3 = arith.constant 0 : index
    %c0_4 = arith.constant 0 : index
    %2 = vector.load %arg5[%c0_3, %c0_4] : memref<2x169xf32, #tpu.memory_space<vmem>>, vector<2x169xf32>
    %3 = arith.addf %1, %2 : vector<2x169xf32>
    %c0_5 = arith.constant 0 : index
    %c0_6 = arith.constant 0 : index
    %4 = vector.load %arg6[%c0_5, %c0_6] : memref<2x1xf32, #tpu.memory_space<vmem>>, vector<2x1xf32>
    %c0_7 = arith.constant 0 : index
    %c0_8 = arith.constant 0 : index
    %5 = vector.load %arg1[%c0_7, %c0_8] : memref<169x169xf32, #tpu.memory_space<vmem>>, vector<169x169xf32>
    %cst = arith.constant dense<0.000000e+00> : vector<2x169xf32>
    %6 = tpu.matmul %0, %5, %cst {dimension_numbers = #tpu.dot_dimension_numbers<[1], [0], [0], [1], [0, 0, 1, 1], [], []>} : vector<2x169xf32>, vector<169x169xf32>, vector<2x169xf32> -> vector<2x169xf32>
    %7 = arith.mulf %0, %0 : vector<2x169xf32>
    %8 = arith.mulf %7, %7 : vector<2x169xf32>
    %9 = arith.mulf %4, %4 : vector<2x1xf32>
    %10 = arith.mulf %9, %9 : vector<2x1xf32>
    %c0_9 = arith.constant 0 : index
    %c0_10 = arith.constant 0 : index
    %11 = vector.load %arg2[%c0_9, %c0_10] : memref<1x169xf32, #tpu.memory_space<vmem>>, vector<1x169xf32>
    %12 = vector.broadcast %10 : vector<2x1xf32> to vector<2x169xf32>
    %13 = arith.subf %8, %12 : vector<2x169xf32>
    %14 = vector.broadcast %11 : vector<1x169xf32> to vector<2x169xf32>
    %15 = arith.mulf %14, %13 : vector<2x169xf32>
    %16 = arith.addf %6, %15 : vector<2x169xf32>
    %17 = arith.subf %16, %3 : vector<2x169xf32>
    %18 = math.absf %17 : vector<2x169xf32>
    %19 = vector.shape_cast %18 : vector<2x169xf32> to vector<1x2x169xf32>
    %cst_11 = arith.constant dense<0.000000e+00> : vector<1xf32>
    %20 = vector.multi_reduction <add>, %19, %cst_11 [1, 2] : vector<1x2x169xf32> to vector<1xf32>
    %21 = vector.shape_cast %20 : vector<1xf32> to vector<1x1x1xf32>
    %22 = vector.extract %21[0, 0, 0] : f32 from vector<1x1x1xf32>
    %23 = vector.broadcast %22 : f32 to vector<1x1xf32>
    %c0_12 = arith.constant 0 : index
    %c0_13 = arith.constant 0 : index
    %24 = vector.load %arg7[%c0_12, %c0_13] : memref<1x1xf32, #tpu.memory_space<vmem>>, vector<1x1xf32>
    tpu.vector_store %arg7[%c0_12, %c0_13], %23 {strides = array<i32>} : memref<1x1xf32, #tpu.memory_space<vmem>>, vector<1x1xf32>,
    return
  }
  func.func @transform_0(%arg0: i32) -> (i32, i32) {
    %c0_i32 = arith.constant 0 : i32
    %c0_i32_0 = arith.constant 0 : i32
    %c0_i32_1 = arith.constant 0 : i32
    return %c0_i32, %c0_i32_0 : i32, i32
  }
  func.func @transform_1(%arg0: i32) -> (i32, i32) {
    %c0_i32 = arith.constant 0 : i32
    %c0_i32_0 = arith.constant 0 : i32
    %c0_i32_1 = arith.constant 0 : i32
    return %c0_i32, %c0_i32_0 : i32, i32
  }
  func.func @transform_2(%arg0: i32) -> (i32, i32) {
    %c0_i32 = arith.constant 0 : i32
    %c0_i32_0 = arith.constant 0 : i32
    return %arg0, %c0_i32 : i32, i32
  }
  func.func @transform_3(%arg0: i32) -> (i32, i32) {
    %c0_i32 = arith.constant 0 : i32
    %c0_i32_0 = arith.constant 0 : i32
    return %arg0, %c0_i32 : i32, i32
  }
  func.func @transform_4(%arg0: i32) -> (i32, i32) {
    %c0_i32 = arith.constant 0 : i32
    %c0_i32_0 = arith.constant 0 : i32
    return %arg0, %c0_i32 : i32, i32
  }
  func.func @transform_5(%arg0: i32) -> (i32, i32) {
    %c0_i32 = arith.constant 0 : i32
    %c0_i32_0 = arith.constant 0 : i32
    return %arg0, %c0_i32 : i32, i32
  }
  func.func @transform_6(%arg0: i32) -> (i32, i32) {
    %c0_i32 = arith.constant 0 : i32
    %c0_i32_0 = arith.constant 0 : i32
    return %arg0, %c0_i32 : i32, i32
  }
}

</mosaic_0001>

<llo_original>
// kernel: la_energia_no_aparece.1
$region0: #{la_energia_no_aparece.1}
  #allocation0 [shape = 'u32[]', space=smem, size = 0x4, offset = 0x4, fixed_abs, tag = 'smem constant byte address 0x4 - core index']
  #allocation1 [shape = 'u32[144,128]{1,0:T(1,128)}', space=vmem, size = 0x12000, scoped, tag = 'internal scratch']
  %s0 = inlined_call_operand.hbm [shape: f32[169,169], index: 0, kind: input, shape index: {}]
  %s1 = inlined_call_operand.vmem [shape: f32[1,169], index: 1, kind: input, shape index: {}]
  %s2 = inlined_call_operand.vmem [shape: f32[2,169], index: 2, kind: input, shape index: {}]
  %s3 = inlined_call_operand.vmem [shape: f32[2,169], index: 3, kind: input, shape index: {}]
  %s4 = inlined_call_operand.vmem [shape: f32[2,169], index: 4, kind: input, shape index: {}]
  %s5 = inlined_call_operand.vmem [shape: f32[2,1], index: 5, kind: input, shape index: {}]
  %s6 = inlined_call_operand.hbm [shape: f32[1,1], index: 6, kind: output, shape index: {}]
  %s7 = sld [smem:[#allocation0]]
  $region38: #{la_energia_no_aparece.1} parent=0
    _
  %s9 = ssub.s32 1, %s7
  %s10 = scalar_select 0, %s9, %s7
  $region1: #{la_energia_no_aparece.1} parent=0
    #allocation2 [shape = 'u8[180224]{0}', space=vmem, size = 0x2c000, scoped, tag = 'input window, operand 0, single buffered']
    #allocation3 [shape = 's32[1]{0}', space=sflag, size = 0x4, scoped, tag = 'scoped memory for la_energia_no_aparece.1']
    #allocation4 [shape = 's32[1]{0}', space=sflag, size = 0x4, scoped, tag = 'scoped memory for la_energia_no_aparece.1']
    #allocation5 [shape = 'u8[512]{0}', space=vmem, size = 0x400, scoped, tag = 'output window, operand 0, single buffered']
    %11 = vsyncpa [#allocation3], 0
    %12 = vsyncpa [#allocation4], 0
    // Predicated region
    $region2: #{la_energia_no_aparece.1} parent=1 // pred_check
      _
    $region3: #{la_energia_no_aparece.1} parent=1 // pred_check_branch
      %14 = sbr.rel (0) target = $region5
    $region4: #{la_energia_no_aparece.1} parent=1 // pred_region
      %s16 = ssub.s32 5632, 5632
      %17 = vsyncadd [#allocation3], %s16
      %s18 = sshll.u32 [#allocation2], 4
      %s19 = int_to_ptr.vmem [resolvable:$true] %s18
      %24 = dma.hbm_to_vmem [thread:$0]  %s0, 5632, %s19, [#allocation3], 256, 256, 16
    $region5: #{la_energia_no_aparece.1} parent=1 // pred_fallthru
      _
    // Predicated region
    $region6: #{la_energia_no_aparece.1} parent=1 // pred_check
      _
    $region7: #{la_energia_no_aparece.1} parent=1 // pred_check_branch
      %26 = sbr.rel (0) target = $region9
    $region8: #{la_energia_no_aparece.1} parent=1 // pred_region
      _
    $region9: #{la_energia_no_aparece.1} parent=1 // pred_fallthru
      _
    // Predicated region
    $region10: #{la_energia_no_aparece.1} parent=1 // pred_check
      _
    $region11: #{la_energia_no_aparece.1} parent=1 // pred_check_branch
      %28 = sbr.rel (0) target = $region13
    $region12: #{la_energia_no_aparece.1} parent=1 // pred_region
      _
    $region13: #{la_energia_no_aparece.1} parent=1 // pred_fallthru
      _
    // Predicated region
    $region14: #{la_energia_no_aparece.1} parent=1 // pred_check
      _
    $region15: #{la_energia_no_aparece.1} parent=1 // pred_check_branch
      %30 = sbr.rel (0) target = $region17
    $region16: #{la_energia_no_aparece.1} parent=1 // pred_region
      _
    $region17: #{la_energia_no_aparece.1} parent=1 // pred_fallthru
      _
    // Predicated region
    $region18: #{la_energia_no_aparece.1} parent=1 // pred_check
      _
    $region19: #{la_energia_no_aparece.1} parent=1 // pred_check_branch
      %32 = sbr.rel (0) target = $region21
    $region20: #{la_energia_no_aparece.1} parent=1 // pred_region
      _
    $region21: #{la_energia_no_aparece.1} parent=1 // pred_fallthru
      _
    // Predicated region
    $region22: #{la_energia_no_aparece.1} parent=1 // pred_check
      _
    $region23: #{la_energia_no_aparece.1} parent=1 // pred_check_branch
      %34 = sbr.rel (0) target = $region25
    $region24: #{la_energia_no_aparece.1} parent=1 // pred_region
      _
    $region25: #{la_energia_no_aparece.1} parent=1 // pred_fallthru
      _
    // Predicated region
    $region26: #{la_energia_no_aparece.1} parent=1 // pred_check
      _
    $region27: #{la_energia_no_aparece.1} parent=1 // pred_check_branch
      %36 = sbr.rel (0) target = $region29
    $region28: #{la_energia_no_aparece.1} parent=1 // pred_region
      %37 = dma.done [#allocation3], 5632
    $region29: #{la_energia_no_aparece.1} parent=1 // pred_fallthru
      _
    %v38 = vld [vmem:[%s2] sm:$0xf]
    %v39 = vld [vmem:[%s3] sm:$0xf]
    %v40 = vld [vmem:[%s4] sm:$0xf]
    %v41 = vadd.f32 %v39, %v40
    %v42 = vld [vmem:[%s5] sm:$0x3]
    %v43 = vld [vmem:[#allocation2] sm:$0xff]
    %v44 = vld [vmem:[#allocation2 + $0x8] sm:$0xff]
    %v45 = vld [vmem:[#allocation2 + $0x10] sm:$0xff]
    %v46 = vld [vmem:[#allocation2 + $0x18] sm:$0xff]
    %v47 = vld [vmem:[#allocation2 + $0x20] sm:$0xff]
    %v48 = vld [vmem:[#allocation2 + $0x28] sm:$0xff]
    %v49 = vld [vmem:[#allocation2 + $0x30] sm:$0xff]
    %v50 = vld [vmem:[#allocation2 + $0x38] sm:$0xff]
    %v51 = vld [vmem:[#allocation2 + $0x40] sm:$0xff]
    %v52 = vld [vmem:[#allocation2 + $0x48] sm:$0xff]
    %v53 = vld [vmem:[#allocation2 + $0x50] sm:$0xff]
    %v54 = vld [vmem:[#allocation2 + $0x58] sm:$0xff]
    %v55 = vld [vmem:[#allocation2 + $0x60] sm:$0xff]
    %v56 = vld [vmem:[#allocation2 + $0x68] sm:$0xff]
    %v57 = vld [vmem:[#allocation2 + $0x70] sm:$0xff]
    %v58 = vld [vmem:[#allocation2 + $0x78] sm:$0xff]
    %v59 = vld [vmem:[#allocation2 + $0x80] sm:$0xff]
    %v60 = vld [vmem:[#allocation2 + $0x88] sm:$0xff]
    %v61 = vld [vmem:[#allocation2 + $0x90] sm:$0xff]
    %v62 = vld [vmem:[#allocation2 + $0x98] sm:$0xff]
    %v63 = vld [vmem:[#allocation2 + $0xa0] sm:$0xff]
    %v64 = vld [vmem:[#allocation2 + $0xa8] sm:$0xff]
    %v65 = vld [vmem:[#allocation2 + $0xb0] sm:$0xff]
    %v66 = vld [vmem:[#allocation2 + $0xb8] sm:$0xff]
    %v67 = vld [vmem:[#allocation2 + $0xc0] sm:$0xff]
    %v68 = vld [vmem:[#allocation2 + $0xc8] sm:$0xff]
    %v69 = vld [vmem:[#allocation2 + $0xd0] sm:$0xff]
    %v70 = vld [vmem:[#allocation2 + $0xd8] sm:$0xff]
    %v71 = vld [vmem:[#allocation2 + $0xe0] sm:$0xff]
    %v72 = vld [vmem:[#allocation2 + $0xe8] sm:$0xff]
    %v73 = vld [vmem:[#allocation2 + $0xf0] sm:$0xff]
    %v74 = vld [vmem:[#allocation2 + $0xf8] sm:$0xff]
    %v75 = vld [vmem:[#allocation2 + $0x100] sm:$0xff]
    %v76 = vld [vmem:[#allocation2 + $0x108] sm:$0xff]
    %v77 = vld [vmem:[#allocation2 + $0x110] sm:$0xff]
    %v78 = vld [vmem:[#allocation2 + $0x118] sm:$0xff]
    %v79 = vld [vmem:[#allocation2 + $0x120] sm:$0xff]
    %v80 = vld [vmem:[#allocation2 + $0x128] sm:$0xff]
    %v81 = vld [vmem:[#allocation2 + $0x130] sm:$0xff]
    %v82 = vld [vmem:[#allocation2 + $0x138] sm:$0xff]
    %v83 = vld [vmem:[#allocation2 + $0x140] sm:$0xff]
    %v84 = vld [vmem:[#allocation2 + $0x148] sm:$0xff]
    %v85 = vld [vmem:[#allocation2 + $0x150] sm:$0x1]
    %v86 = vld [vmem:[#allocation2 + $0x158] sm:$0x1]
    %v87 = vmul.f32 %v38, %v38
    %v88 = vmul.f32 %v87, %v87
    %v89 = vmul.f32 %v42, %v42
    %v90 = vmul.f32 %v89, %v89
    %v91 = vld [vmem:[%s1] sm:$0x3]
    %93 = vset.pattern.permute.xlu0 0
    %94 = vperm.xlu0 %93, %v90
    %v95 = vpop.permute.xlu0 %94
    %v97 = vunpack.c.l.s4 269488144
    %v98 = vunpack.c.0.s8 %v97
    %v99 = vlaneseq
    %v100 = vshrl.u32 %v99, 7
    %v101 = vsub.s32 %v98, %v100
    %v102 = vrot.slane %v95, %v101
    %v104 = vsub.f32 %v88, %v102
    %v106 = vlaneseq
    %v107 = vshrl.u32 %v106, 7
    %v108 = vsub.s32 0, %v107
    %v109 = vrot.slane %v91, %v108
    %v110 = vlaneseq
    %v111 = vshrl.u32 %v110, 7
    %v112 = vsub.s32 1, %v111
    %v113 = vrot.slane %v91, %v112
    %v118 = vunpack.c.l.s4 1983009808
    %v119 = vunpack.c.0.s8 %v118
    %v120 = vlaneseq
    %v121 = vshrl.u32 %v120, 7
    %v122 = vsub.s32 %v119, %v121
    %v123 = vrot.slane %v104, %v122
    %v124 = vcombine.high %v123, %v123
    %v127 = vmul.f32 %v109, %v123
    %v128 = vmul.f32 %v113, %v124
    %v131 = vunpack.c.l.s4 1983009808
    %v132 = vunpack.c.0.s8 %v131
    %v133 = vlaneseq
    %v134 = vshrl.u32 %v133, 7
    %v135 = vsub.s32 %v132, %v134
    %v136 = vrot.slane %v38, %v135
    %v137 = vcombine.high %v136, %v136
    %vm139 = vcmask 334848
    %v140 = vsel %vm139, %v137, 0
    %vm142 = vcmask 1040384
    %v144 = vsel %vm142, %v85, 0
    %v147 = vsel %vm142, %v86, 0
    %149 = vmatprep.subr.mxu0 %v44
    %150 = vmatpush1.msra.mxu0 %v43
    %151 = vmatprep.subr.mxu0 %v46
    %152 = vmatpush1.msra.mxu0 %v45
    %153 = vmatprep.subr.mxu0 %v48
    %154 = vmatpush1.msra.mxu0 %v47
    %155 = vmatprep.subr.mxu0 %v50
    %156 = vmatpush1.msra.mxu0 %v49
    %157 = vmatprep.subr.mxu0 %v52
    %158 = vmatpush1.msra.mxu0 %v51
    %159 = vmatprep.subr.mxu0 %v54
    %160 = vmatpush1.msra.mxu0 %v53
    %161 = vmatprep.subr.mxu0 %v56
    %162 = vmatpush1.msra.mxu0 %v55
    %163 = vmatprep.subr.mxu0 %v58
    %164 = vmatpush1.msra.mxu0 %v57
    %165 = vmatprep.subr.mxu0 %v60
    %166 = vmatpush1.msra.mxu0 %v59
    %167 = vmatprep.subr.mxu0 %v62
    %168 = vmatpush1.msra.mxu0 %v61
    %169 = vmatprep.subr.mxu0 %v64
    %170 = vmatpush1.msra.mxu0 %v63
    %171 = vmatprep.subr.mxu0 %v66
    %172 = vmatpush1.msra.mxu0 %v65
    %173 = vmatprep.subr.mxu0 %v68
    %174 = vmatpush1.msra.mxu0 %v67
    %175 = vmatprep.subr.mxu0 %v70
    %176 = vmatpush1.msra.mxu0 %v69
    %177 = vmatprep.subr.mxu0 %v72
    %178 = vmatpush1.msra.mxu0 %v71
    %179 = vmatprep.subr.mxu0 %v74
    %180 = vmatpush1.msra.mxu0 %v73
    %181 = vmatprep.subr.mxu0 %v76
    %182 = vmatpush1.msra.mxu0 %v75
    %183 = vmatprep.subr.mxu0 %v78
    %184 = vmatpush1.msra.mxu0 %v77
    %185 = vmatprep.subr.mxu0 %v80
    %186 = vmatpush1.msra.mxu0 %v79
    %187 = vmatprep.subr.mxu0 %v82
    %188 = vmatpush1.msra.mxu0 %v81
    %189 = vmatprep.subr.mxu0 %v84
    %190 = vmatpush1.msra.mxu0 %v83
    %191 = vmatprep.subr.mxu0 %v147
    %192 = vmatpush1.msra.mxu0 %v144
    %193 = vmatprep.subr.mxu0 0.0
    %194 = vmatpush1.msra.mxu0 0.0
    %195 = vmatprep.subr.mxu0 0.0
    %196 = vmatpush1.msra.mxu0 0.0
    %197 = vmatprep.subr.mxu0 0.0
    %198 = vmatpush1.msra.mxu0 0.0
    %199 = vmatprep.subr.mxu0 0.0
    %200 = vmatpush1.msra.mxu0 0.0
    %201 = vmatprep.subr.mxu0 0.0
    %202 = vmatpush1.msra.mxu0 0.0
    %203 = vmatprep.subr.mxu0 0.0
    %204 = vmatpush1.msra.mxu0 0.0
    %205 = vmatprep.subr.mxu0 0.0
    %206 = vmatpush1.msra.mxu0 0.0
    %207 = vmatprep.subr.mxu0 0.0
    %208 = vmatpush1.msra.mxu0 0.0
    %209 = vmatprep.subr.mxu0 0.0
    %210 = vmatpush1.msra.mxu0 0.0
    %211 = vmatprep.subr.mxu0 0.0
    %212 = vmatpush1.msra.mxu0 0.0
    %213 = vmatprep.mubr.f32.mxu0 %v140
    %214 = vmatmul.mubr.f32.gmra.mrb[0].mxu0 %v136
    %v215 = vpop.f32.mrb[0].mxu0
    %v216 = vadd.f32 %v127, %v215
    %v217 = vpop.f32.mrb[0].mxu0
    %v218 = vadd.f32 %v128, %v217
    %219 = vdwg.mxu0
    %v222 = vunpack.c.l.s4 1983009808
    %v223 = vunpack.c.0.s8 %v222
    %v224 = vlaneseq
    %v225 = vshrl.u32 %v224, 7
    %v226 = vsub.s32 %v223, %v225
    %v227 = vrot.slane %v41, %v226
    %v228 = vcombine.high %v227, %v227
    %v231 = vsub.f32 %v216, %v227
    %v232 = vsub.f32 %v218, %v228
    %v233 = vand.u32 2147483647, %v231
    %v234 = vand.u32 2147483647, %v232
    %vm235 = vcmask 1041408
    %v236 = vsel %vm235, %v233, 0.0
    %vm237 = vcmask 328704
    %v238 = vsel %vm237, %v234, 0.0
    %v239 = vadd.f32 %v236, %v238
    %240 = vadd.xlane.f32.xlu0 %v239
    %v241 = vpop.xlane.xlu0 %240
    %v242 = vrot.slane %v241, 4
    %v243 = vadd.f32 %v241, %v242
    %v244 = vrot.slane %v243, 2
    %v245 = vadd.f32 %v243, %v244
    %v246 = vrot.slane %v245, 1
    %v247 = vadd.f32 %v245, %v246
    %s248 = vtos %v247
    %v249 = vstv %s248
    %vm250 = vcmask 0
    %251 = vst.msk [vmem:[#allocation5] sm:$0x1] %vm250, %v249
    // Predicated region
    $region30: #{la_energia_no_aparece.1} parent=1 // pred_check
      _
    $region31: #{la_energia_no_aparece.1} parent=1 // pred_check_branch
      %253 = sbr.rel (0) target = $region33
    $region32: #{la_energia_no_aparece.1} parent=1 // pred_region
      %s255 = ssub.s32 16, 16
      %256 = vsyncadd [#allocation4], %s255
      %s258 = sshll.u32 [#allocation5], 4
      %s259 = int_to_ptr.vmem [resolvable:$true] %s258
      %261 = dma.vmem_to_hbm [thread:$0]  %s259, 16, %s6, [#allocation4]
    $region33: #{la_energia_no_aparece.1} parent=1 // pred_fallthru
      _
    // Predicated region
    $region34: #{la_energia_no_aparece.1} parent=1 // pred_check
      _
    $region35: #{la_energia_no_aparece.1} parent=1 // pred_check_branch
      %263 = sbr.rel (0) target = $region37
    $region36: #{la_energia_no_aparece.1} parent=1 // pred_region
      %264 = dma.done [#allocation4], 16
    $region37: #{la_energia_no_aparece.1} parent=1 // pred_fallthru
      _
    %265 = vsyncpa [#allocation3], 1
    %266 = vsyncpa [#allocation4], 1

</llo_original>
